<compile_context>
chip_gen: v7x
topology: tpu7x:2x2x1
jax: 0.10.0
libtpu: 0.0.40
codegen_flags: <defaults>
</compile_context>

<pallas_src>
import jax
import jax.numpy as jnp
from jax.experimental import pallas as pl
from jax.experimental.pallas import tpu as pltpu

_LANES = 128  # TPU vreg lane width


def _make_packed_kernel(feats, pack, eps):
    """feats < 128 and feats | 128: `pack` logical rows per 128-lane slab.

    Per-logical-row (segmented) sums use a block-diagonal 0/1 matrix on the
    otherwise-idle MXU, so every lane receives its own segment's sum and the
    remaining math is lane-local VPU/EUP work. Two-pass stats avoid the
    one-pass cancellation issue.
    """
    pf = feats * pack
    assert pf == _LANES and (feats & (feats - 1)) == 0  # feats is a power of 2
    shift = (feats - 1).bit_length()                    # log2(feats)
    inv_f = 1.0 / feats
    inv_fm1 = 1.0 / (feats - 1)                         # unbiased (ddof=1)
    hi = jax.lax.Precision.HIGHEST                      # keep f32 accuracy on MXU

    def kernel(x_ref, a_ref, b_ref, o_ref):
        x = x_ref[...].astype(jnp.float32)              # (T, pf)
        # Block-diagonal segment matrix built in-kernel: seg[i, j] = 1 iff
        # lanes i and j belong to the same logical row (segment of `feats`).
        ri = jax.lax.broadcasted_iota(jnp.int32, (pf, pf), 0) >> shift
        ci = jax.lax.broadcasted_iota(jnp.int32, (pf, pf), 1) >> shift
        seg = (ri == ci).astype(jnp.float32)
        # Pass 1: segmented sum -> per-lane mean of its own logical row.
        ssum = jnp.dot(x, seg, precision=hi, preferred_element_type=jnp.float32)
        mean = ssum * inv_f
        xc = x - mean
        # Pass 2: segmented sum of centered squares -> unbiased variance.
        ssq = jnp.dot(xc * xc, seg, precision=hi,
                      preferred_element_type=jnp.float32)
        std = jnp.sqrt(ssq * inv_fm1)
        inv = 1.0 / (std + eps)                         # exact (approx broke tol)
        if o_ref.dtype == jnp.bfloat16:
            # Stats stay f32; elementwise affine in bf16 (2x VPU throughput on
            # v6e/v7x, within bf16 output precision anyway).
            o_ref[...] = (xc.astype(jnp.bfloat16) * inv.astype(jnp.bfloat16)
                          * a_ref[...].astype(jnp.bfloat16)
                          + b_ref[...].astype(jnp.bfloat16))
        else:
            o_ref[...] = ((xc * inv) * a_ref[...].astype(jnp.float32)
                          + b_ref[...].astype(jnp.float32)).astype(o_ref.dtype)

    return kernel


def _make_rowwise_kernel(feats, eps):
    """Fallback: one logical row per physical row (feats >= 128 or awkward)."""
    inv_f = 1.0 / feats
    inv_fm1 = 1.0 / (feats - 1)

    def kernel(x_ref, a_ref, b_ref, o_ref):
        x = x_ref[...].astype(jnp.float32)              # (T, feats)
        mean = jnp.sum(x, axis=-1, keepdims=True) * inv_f
        xc = x - mean
        var = jnp.sum(xc * xc, axis=-1, keepdims=True) * inv_fm1
        std = jnp.sqrt(var)
        inv = 1.0 / (std + eps)
        if o_ref.dtype == jnp.bfloat16:
            o_ref[...] = (xc.astype(jnp.bfloat16) * inv.astype(jnp.bfloat16)
                          * a_ref[...].astype(jnp.bfloat16)
                          + b_ref[...].astype(jnp.bfloat16))
        else:
            o_ref[...] = ((xc * inv) * a_ref[...].astype(jnp.float32)
                          + b_ref[...].astype(jnp.float32)).astype(o_ref.dtype)

    return kernel


def layer_norm(x, a_2, b_2, *, eps=1e-6, block_rows=None):
    """LayerNorm over the last axis, matching the PyTorch module's forward."""
    orig_shape = x.shape
    feats = orig_shape[-1]
    if feats < 2:
        raise ValueError("unbiased std (ddof=1) requires features >= 2")

    x2 = x.reshape(-1, feats)
    rows = x2.shape[0]
    itemsize = jnp.dtype(x.dtype).itemsize
    row_align = 16 if itemsize == 2 else 8              # bf16 packs 16 sublanes

    # Lane-dense packing: feats < 128 and dividing 128 -> pack logical rows
    # into one 128-lane slab so DMA and stores are full, unmasked vregs.
    if feats < _LANES and _LANES % feats == 0:
        pack = _LANES // feats
    else:
        pack = 1
        # TODO(synk): pad the feature axis to a multiple of 128 (with a valid-
        # lane mask in the stats) so shapes like feats=48/96/160 also get
        # lane-dense stores instead of masked vst.msk.
    pf = feats * pack

    # Pad only to a multiple of `pack` (at most pack-1 rows; often nothing).
    # The partial final *block* is handled by Pallas grid masking instead of a
    # full-tensor pad to grid*block_rows (which cost an extra HBM round trip).
    n_packed = pl.cdiv(rows, pack)
    if rows % pack:
        x2 = jnp.pad(x2, ((0, n_packed * pack - rows), (0, 0)))
    xp = x2.reshape(n_packed, pf)

    # Generation-aware tile budget.
    try:
        vmem_cap = int(getattr(pltpu.get_tpu_info(), "vmem_capacity_bytes",
                               64 * 1024 * 1024))
    except Exception:  # interpret mode / no TPU visible: assume smallest VMEM
        vmem_cap = 64 * 1024 * 1024
    if block_rows is None:
        # ~4 MiB f32 input tile on 128 MiB-VMEM parts (v5e/v6e), ~2 MiB on v7x.
        budget = (4 if vmem_cap >= 96 * 1024 * 1024 else 2) * 1024 * 1024
        block_rows = max(row_align, budget // (pf * 4))
    # Keep >= ~4 grid steps when the problem is big enough: v7x megacore needs
    # grid >= 2 and the DMA pipeline needs a few steps to overlap at all.
    quarter = pl.cdiv(pl.cdiv(n_packed, 4), row_align) * row_align
    block_rows = min(block_rows, max(row_align, quarter))
    block_rows = max(row_align, (block_rows // row_align) * row_align)
    if block_rows > n_packed:
        block_rows = n_packed            # single full block, no masking needed
    grid = pl.cdiv(n_packed, block_rows)

    # VMEM limit from the actual footprint: double-buffered in/out tiles plus
    # headroom for the in-kernel f32 temporaries (x cast, centered, squared,
    # matmul results, epilogue). Avoids starving v7x's 64 MiB VMEM.
    tile_in = block_rows * pf * itemsize
    tile_f32 = block_rows * pf * 4
    footprint = 4 * tile_in + 8 * tile_f32 + (1 << 20)
    vmem_limit = int(min(max(footprint, 16 * 1024 * 1024), vmem_cap * 3 // 4))

    a_p = jnp.tile(a_2.reshape(1, feats), (1, pack))
    b_p = jnp.tile(b_2.reshape(1, feats), (1, pack))

    row_spec = pl.BlockSpec((block_rows, pf), lambda i: (i, 0))
    vec_spec = pl.BlockSpec((1, pf), lambda i: (0, 0))

    kernel = (_make_packed_kernel(feats, pack, eps) if pack > 1
              else _make_rowwise_kernel(feats, eps))

    out = pl.pallas_call(
        kernel,
        out_shape=jax.ShapeDtypeStruct((n_packed, pf), x.dtype),
        grid_spec=pltpu.PrefetchScalarGridSpec(
            num_scalar_prefetch=0,
            grid=(grid,),
            in_specs=[row_spec, vec_spec, vec_spec],
            out_specs=row_spec,
        ),
        compiler_params=pltpu.CompilerParams(
            dimension_semantics=("parallel",),   # shard rows on v7x's 2 TCs
            vmem_limit_bytes=vmem_limit,
        ),
        cost_estimate=pl.CostEstimate(
            flops=12 * rows * feats,
            transcendentals=rows,
            bytes_accessed=2 * rows * feats * itemsize
            + 2 * feats * jnp.dtype(a_2.dtype).itemsize,
        ),
    )(xp, a_p, b_p)

    out = out.reshape(n_packed * pack, feats)
    if n_packed * pack != rows:
        out = out[:rows]
    return out.reshape(orig_shape)


def layer_norm_ref(x, a_2, b_2, eps=1e-6):
    mean = jnp.mean(x, axis=-1, keepdims=True)
    xc = x - mean
    var = jnp.sum(xc * xc, axis=-1, keepdims=True) / (x.shape[-1] - 1)  # ddof=1
    std = jnp.sqrt(var)
    return a_2 * xc / (std + eps) + b_2


if __name__ == "__main__":
    batch, seq, hidden = 2, 8, 32
    key = jax.random.PRNGKey(0)
    kx, ka, kb = jax.random.split(key, 3)
    x = jax.random.normal(kx, (batch, seq, hidden), dtype=jnp.float32)

    # Module init is ones/zeros; perturb deterministically so the affine
    # (a_2 scale / b_2 shift) path is actually exercised across the lane tiling.
    a_2 = jnp.ones((hidden,), jnp.float32) + 0.1 * jax.random.normal(ka, (hidden,), jnp.float32)
    b_2 = jnp.zeros((hidden,), jnp.float32) + 0.1 * jax.random.normal(kb, (hidden,), jnp.float32)

    out = jax.block_until_ready(layer_norm(x, a_2, b_2))
    ref = layer_norm_ref(x, a_2, b_2)

    assert out.shape == x.shape
    err = float(jnp.max(jnp.abs(out - ref)))
    # Exact reciprocal + two-pass stats + HIGHEST-precision seg matmul -> only
    # MXU f32-pass rounding remains; 1e-3 leaves ample margin.
    assert jnp.allclose(out, ref, atol=1e-3, rtol=1e-3), f"max abs err {err}"
    print("KERNEL_OK")
</pallas_src>

<mosaic_0001>
module attributes {stable_mosaic.version = 11 : i64} {
  func.func @kernel(%arg0: i32, %arg1: memref<4x128xf32, #tpu.memory_space<vmem>>, %arg2: memref<1x128xf32, #tpu.memory_space<vmem>>, %arg3: memref<1x128xf32, #tpu.memory_space<vmem>>, %arg4: memref<4x128xf32, #tpu.memory_space<vmem>>) attributes {dimension_semantics = [#tpu.dimension_semantics<parallel>], iteration_bounds = array<i64: 1>, scalar_prefetch = 0 : i64, scratch_operands = 0 : i64, tpu.core_type = #tpu.core_type<tc>, window_params = [{transform_indices = @transform_0, window_bounds = array<i64: 4, 128>}, {pipeline_mode = #tpu.pipeline_mode<synchronous>, transform_indices = @transform_1, window_bounds = array<i64: 1, 128>}, {pipeline_mode = #tpu.pipeline_mode<synchronous>, transform_indices = @transform_2, window_bounds = array<i64: 1, 128>}, {transform_indices = @transform_3, window_bounds = array<i64: 4, 128>}]} {
    %c0 = arith.constant 0 : index
    %c0_0 = arith.constant 0 : index
    %0 = vector.load %arg1[%c0, %c0_0] : memref<4x128xf32, #tpu.memory_space<vmem>>, vector<4x128xf32>
    %1 = tpu.iota {dimensions = array<i32: 0>} : vector<128x128xi32>
    %c5_i32 = arith.constant 5 : i32
    %2 = vector.broadcast %c5_i32 : i32 to vector<128x128xi32>
    %3 = arith.shrsi %1, %2 : vector<128x128xi32>
    %4 = tpu.iota {dimensions = array<i32: 1>} : vector<128x128xi32>
    %c5_i32_1 = arith.constant 5 : i32
    %5 = vector.broadcast %c5_i32_1 : i32 to vector<128x128xi32>
    %6 = arith.shrsi %4, %5 : vector<128x128xi32>
    %7 = arith.cmpi eq, %3, %6 : vector<128x128xi32>
    %8 = arith.extui %7 : vector<128x128xi1> to vector<128x128xi32>
    %9 = arith.sitofp %8 : vector<128x128xi32> to vector<128x128xf32>
    %cst = arith.constant dense<0.000000e+00> : vector<4x128xf32>
    %10 = tpu.matmul %0, %9, %cst {dimension_numbers = #tpu.dot_dimension_numbers<[1], [0], [0], [1], [0, 0, 1, 1], [], []>, precision = #tpu.contract_precision<fp32>} : vector<4x128xf32>, vector<128x128xf32>, vector<4x128xf32> -> vector<4x128xf32>
    %cst_2 = arith.constant 3.125000e-02 : f32
    %11 = vector.broadcast %cst_2 : f32 to vector<4x128xf32>
    %12 = arith.mulf %10, %11 : vector<4x128xf32>
    %13 = arith.subf %0, %12 : vector<4x128xf32>
    %14 = arith.mulf %13, %13 : vector<4x128xf32>
    %cst_3 = arith.constant dense<0.000000e+00> : vector<4x128xf32>
    %15 = tpu.matmul %14, %9, %cst_3 {dimension_numbers = #tpu.dot_dimension_numbers<[1], [0], [0], [1], [0, 0, 1, 1], [], []>, precision = #tpu.contract_precision<fp32>} : vector<4x128xf32>, vector<128x128xf32>, vector<4x128xf32> -> vector<4x128xf32>
    %cst_4 = arith.constant 0.0322580636 : f32
    %16 = vector.broadcast %cst_4 : f32 to vector<4x128xf32>
    %17 = arith.mulf %15, %16 : vector<4x128xf32>
    %18 = math.sqrt %17 : vector<4x128xf32>
    %cst_5 = arith.constant 9.99999997E-7 : f32
    %19 = vector.broadcast %cst_5 : f32 to vector<4x128xf32>
    %20 = arith.addf %18, %19 : vector<4x128xf32>
    %cst_6 = arith.constant 1.000000e+00 : f32
    %21 = vector.broadcast %cst_6 : f32 to vector<4x128xf32>
    %22 = arith.divf %21, %20 : vector<4x128xf32>
    %23 = arith.mulf %13, %22 : vector<4x128xf32>
    %c0_7 = arith.constant 0 : index
    %c0_8 = arith.constant 0 : index
    %24 = vector.load %arg2[%c0_7, %c0_8] : memref<1x128xf32, #tpu.memory_space<vmem>>, vector<1x128xf32>
    %25 = vector.broadcast %24 : vector<1x128xf32> to vector<4x128xf32>
    %26 = arith.mulf %23, %25 : vector<4x128xf32>
    %c0_9 = arith.constant 0 : index
    %c0_10 = arith.constant 0 : index
    %27 = vector.load %arg3[%c0_9, %c0_10] : memref<1x128xf32, #tpu.memory_space<vmem>>, vector<1x128xf32>
    %28 = vector.broadcast %27 : vector<1x128xf32> to vector<4x128xf32>
    %29 = arith.addf %26, %28 : vector<4x128xf32>
    %c0_11 = arith.constant 0 : index
    %c0_12 = arith.constant 0 : index
    %30 = vector.load %arg4[%c0_11, %c0_12] : memref<4x128xf32, #tpu.memory_space<vmem>>, vector<4x128xf32>
    tpu.vector_store %arg4[%c0_11, %c0_12], %29 {strides = array<i32>} : memref<4x128xf32, #tpu.memory_space<vmem>>, vector<4x128xf32>,
    return
  }
  func.func @transform_0(%arg0: i32) -> (i32, i32) {
    %c0_i32 = arith.constant 0 : i32
    %c0_i32_0 = arith.constant 0 : i32
    return %arg0, %c0_i32 : i32, i32
  }
  func.func @transform_1(%arg0: i32) -> (i32, i32) {
    %c0_i32 = arith.constant 0 : i32
    %c0_i32_0 = arith.constant 0 : i32
    %c0_i32_1 = arith.constant 0 : i32
    return %c0_i32, %c0_i32_0 : i32, i32
  }
  func.func @transform_2(%arg0: i32) -> (i32, i32) {
    %c0_i32 = arith.constant 0 : i32
    %c0_i32_0 = arith.constant 0 : i32
    %c0_i32_1 = arith.constant 0 : i32
    return %c0_i32, %c0_i32_0 : i32, i32
  }
  func.func @transform_3(%arg0: i32) -> (i32, i32) {
    %c0_i32 = arith.constant 0 : i32
    %c0_i32_0 = arith.constant 0 : i32
    return %arg0, %c0_i32 : i32, i32
  }
}

</mosaic_0001>

<llo_original>
// kernel: tpu_custom_call.1
$region0: #{tpu_custom_call.1}
  #allocation0 [shape = 'u32[]', space=smem, size = 0x4, offset = 0x4, fixed_abs, tag = 'smem constant byte address 0x4 - core index']
  #allocation1 [shape = 'u32[144,128]{1,0:T(1,128)}', space=vmem, size = 0x12000, scoped, tag = 'internal scratch']
  %s0 = inlined_call_operand.hbm [shape: f32[4,128], index: 0, kind: input, shape index: {}]
  %s1 = inlined_call_operand.vmem [shape: f32[1,128], index: 1, kind: input, shape index: {}]
  %s2 = inlined_call_operand.vmem [shape: f32[1,128], index: 2, kind: input, shape index: {}]
  %s3 = inlined_call_operand.hbm [shape: f32[4,128], index: 3, kind: output, shape index: {}]
  %s4 = sld [smem:[#allocation0]]
  $region26: #{tpu_custom_call.1} parent=0
    _
  %s6 = ssub.s32 1, %s4
  %s7 = scalar_select 0, %s6, %s4
  $region1: #{tpu_custom_call.1} parent=0
    #allocation2 [shape = 'u8[2048]{0}', space=vmem, size = 0x800, scoped, tag = 'input window, operand 0, single buffered']
    #allocation3 [shape = 's32[1]{0}', space=sflag, size = 0x4, scoped, tag = 'scoped memory for tpu_custom_call.1']
    #allocation4 [shape = 's32[1]{0}', space=sflag, size = 0x4, scoped, tag = 'scoped memory for tpu_custom_call.1']
    #allocation5 [shape = 'u8[2048]{0}', space=vmem, size = 0x800, scoped, tag = 'output window, operand 0, single buffered']
    %8 = vsyncpa [#allocation3], 0
    %9 = vsyncpa [#allocation4], 0
    // Predicated region
    $region2: #{tpu_custom_call.1} parent=1 // pred_check
      _
    $region3: #{tpu_custom_call.1} parent=1 // pred_check_branch
      %11 = sbr.rel (0) target = $region5
    $region4: #{tpu_custom_call.1} parent=1 // pred_region
      %s13 = ssub.s32 64, 64
      %14 = vsyncadd [#allocation3], %s13
      %s16 = sshll.u32 [#allocation2], 4
      %s17 = int_to_ptr.vmem [resolvable:$true] %s16
      %19 = dma.hbm_to_vmem [thread:$0]  %s0, 64, %s17, [#allocation3]
    $region5: #{tpu_custom_call.1} parent=1 // pred_fallthru
      _
    // Predicated region
    $region6: #{tpu_custom_call.1} parent=1 // pred_check
      _
    $region7: #{tpu_custom_call.1} parent=1 // pred_check_branch
      %21 = sbr.rel (0) target = $region9
    $region8: #{tpu_custom_call.1} parent=1 // pred_region
      _
    $region9: #{tpu_custom_call.1} parent=1 // pred_fallthru
      _
    // Predicated region
    $region10: #{tpu_custom_call.1} parent=1 // pred_check
      _
    $region11: #{tpu_custom_call.1} parent=1 // pred_check_branch
      %23 = sbr.rel (0) target = $region13
    $region12: #{tpu_custom_call.1} parent=1 // pred_region
      _
    $region13: #{tpu_custom_call.1} parent=1 // pred_fallthru
      _
    // Predicated region
    $region14: #{tpu_custom_call.1} parent=1 // pred_check
      _
    $region15: #{tpu_custom_call.1} parent=1 // pred_check_branch
      %25 = sbr.rel (0) target = $region17
    $region16: #{tpu_custom_call.1} parent=1 // pred_region
      %26 = dma.done [#allocation3], 64
    $region17: #{tpu_custom_call.1} parent=1 // pred_fallthru
      _
    %v27 = vld [vmem:[#allocation2] sm:$0xf]
    %v28 = vlaneseq
    %v29 = vshrl.u32 %v28, 7
    %v30 = vadd.s32 %v29, 8
    %v31 = vadd.s32 %v29, 16
    %v32 = vadd.s32 %v29, 24
    %v33 = vadd.s32 %v29, 32
    %v34 = vadd.s32 %v29, 40
    %v35 = vadd.s32 %v29, 48
    %v36 = vadd.s32 %v29, 56
    %v37 = vadd.s32 %v29, 64
    %v38 = vadd.s32 %v29, 72
    %v39 = vadd.s32 %v29, 80
    %v40 = vadd.s32 %v29, 88
    %v41 = vadd.s32 %v29, 96
    %v42 = vadd.s32 %v29, 104
    %v43 = vadd.s32 %v29, 112
    %v44 = vadd.s32 %v29, 120
    %v45 = vshra.s32 %v29, 5
    %v46 = vshra.s32 %v30, 5
    %v47 = vshra.s32 %v31, 5
    %v48 = vshra.s32 %v32, 5
    %v49 = vshra.s32 %v33, 5
    %v50 = vshra.s32 %v34, 5
    %v51 = vshra.s32 %v35, 5
    %v52 = vshra.s32 %v36, 5
    %v53 = vshra.s32 %v37, 5
    %v54 = vshra.s32 %v38, 5
    %v55 = vshra.s32 %v39, 5
    %v56 = vshra.s32 %v40, 5
    %v57 = vshra.s32 %v41, 5
    %v58 = vshra.s32 %v42, 5
    %v59 = vshra.s32 %v43, 5
    %v60 = vshra.s32 %v44, 5
    %v61 = vlaneseq
    %v62 = vand.u32 %v61, 127
    %v63 = vshra.s32 %v62, 5
    %vm64 = vcmp.eq.s32.totalorder %v45, %v63
    %vm65 = vcmp.eq.s32.totalorder %v46, %v63
    %vm66 = vcmp.eq.s32.totalorder %v47, %v63
    %vm67 = vcmp.eq.s32.totalorder %v48, %v63
    %vm68 = vcmp.eq.s32.totalorder %v49, %v63
    %vm69 = vcmp.eq.s32.totalorder %v50, %v63
    %vm70 = vcmp.eq.s32.totalorder %v51, %v63
    %vm71 = vcmp.eq.s32.totalorder %v52, %v63
    %vm72 = vcmp.eq.s32.totalorder %v53, %v63
    %vm73 = vcmp.eq.s32.totalorder %v54, %v63
    %vm74 = vcmp.eq.s32.totalorder %v55, %v63
    %vm75 = vcmp.eq.s32.totalorder %v56, %v63
    %vm76 = vcmp.eq.s32.totalorder %v57, %v63
    %vm77 = vcmp.eq.s32.totalorder %v58, %v63
    %vm78 = vcmp.eq.s32.totalorder %v59, %v63
    %vm79 = vcmp.eq.s32.totalorder %v60, %v63
    %v80 = vsel %vm64, 1, 0
    %v81 = vsel %vm65, 1, 0
    %v82 = vsel %vm66, 1, 0
    %v83 = vsel %vm67, 1, 0
    %v84 = vsel %vm68, 1, 0
    %v85 = vsel %vm69, 1, 0
    %v86 = vsel %vm70, 1, 0
    %v87 = vsel %vm71, 1, 0
    %v88 = vsel %vm72, 1, 0
    %v89 = vsel %vm73, 1, 0
    %v90 = vsel %vm74, 1, 0
    %v91 = vsel %vm75, 1, 0
    %v92 = vsel %vm76, 1, 0
    %v93 = vsel %vm77, 1, 0
    %v94 = vsel %vm78, 1, 0
    %v95 = vsel %vm79, 1, 0
    %v96 = vcvt.s32.f32 %v80
    %v97 = vcvt.s32.f32 %v81
    %v98 = vcvt.s32.f32 %v82
    %v99 = vcvt.s32.f32 %v83
    %v100 = vcvt.s32.f32 %v84
    %v101 = vcvt.s32.f32 %v85
    %v102 = vcvt.s32.f32 %v86
    %v103 = vcvt.s32.f32 %v87
    %v104 = vcvt.s32.f32 %v88
    %v105 = vcvt.s32.f32 %v89
    %v106 = vcvt.s32.f32 %v90
    %v107 = vcvt.s32.f32 %v91
    %v108 = vcvt.s32.f32 %v92
    %v109 = vcvt.s32.f32 %v93
    %v110 = vcvt.s32.f32 %v94
    %v111 = vcvt.s32.f32 %v95
    %112 = vmatprep.subr.mxu0 0.0
    %v113 = vand.u32 %v96, 4294901760
    %114 = vmatpush1.msra.mxu0 %v113
    %115 = vmatprep.subr.mxu0 0.0
    %v116 = vand.u32 %v97, 4294901760
    %117 = vmatpush1.msra.mxu0 %v116
    %118 = vmatprep.subr.mxu0 0.0
    %v119 = vand.u32 %v98, 4294901760
    %120 = vmatpush1.msra.mxu0 %v119
    %121 = vmatprep.subr.mxu0 0.0
    %v122 = vand.u32 %v99, 4294901760
    %123 = vmatpush1.msra.mxu0 %v122
    %124 = vmatprep.subr.mxu0 0.0
    %v125 = vand.u32 %v100, 4294901760
    %126 = vmatpush1.msra.mxu0 %v125
    %127 = vmatprep.subr.mxu0 0.0
    %v128 = vand.u32 %v101, 4294901760
    %129 = vmatpush1.msra.mxu0 %v128
    %130 = vmatprep.subr.mxu0 0.0
    %v131 = vand.u32 %v102, 4294901760
    %132 = vmatpush1.msra.mxu0 %v131
    %133 = vmatprep.subr.mxu0 0.0
    %v134 = vand.u32 %v103, 4294901760
    %135 = vmatpush1.msra.mxu0 %v134
    %136 = vmatprep.subr.mxu0 0.0
    %v137 = vand.u32 %v104, 4294901760
    %138 = vmatpush1.msra.mxu0 %v137
    %139 = vmatprep.subr.mxu0 0.0
    %v140 = vand.u32 %v105, 4294901760
    %141 = vmatpush1.msra.mxu0 %v140
    %142 = vmatprep.subr.mxu0 0.0
    %v143 = vand.u32 %v106, 4294901760
    %144 = vmatpush1.msra.mxu0 %v143
    %145 = vmatprep.subr.mxu0 0.0
    %v146 = vand.u32 %v107, 4294901760
    %147 = vmatpush1.msra.mxu0 %v146
    %148 = vmatprep.subr.mxu0 0.0
    %v149 = vand.u32 %v108, 4294901760
    %150 = vmatpush1.msra.mxu0 %v149
    %151 = vmatprep.subr.mxu0 0.0
    %v152 = vand.u32 %v109, 4294901760
    %153 = vmatpush1.msra.mxu0 %v152
    %154 = vmatprep.subr.mxu0 0.0
    %v155 = vand.u32 %v110, 4294901760
    %156 = vmatpush1.msra.mxu0 %v155
    %157 = vmatprep.subr.mxu0 0.0
    %v158 = vand.u32 %v111, 4294901760
    %159 = vmatpush1.msra.mxu0 %v158
    %160 = vmatprep.subr.mxu0 0.0
    %161 = vmatpush1.msra.mxu0 0.0
    %162 = vmatprep.subr.mxu0 0.0
    %163 = vmatpush1.msra.mxu0 0.0
    %164 = vmatprep.subr.mxu0 0.0
    %165 = vmatpush1.msra.mxu0 0.0
    %166 = vmatprep.subr.mxu0 0.0
    %167 = vmatpush1.msra.mxu0 0.0
    %168 = vmatprep.subr.mxu0 0.0
    %169 = vmatpush1.msra.mxu0 0.0
    %170 = vmatprep.subr.mxu0 0.0
    %171 = vmatpush1.msra.mxu0 0.0
    %172 = vmatprep.subr.mxu0 0.0
    %173 = vmatpush1.msra.mxu0 0.0
    %174 = vmatprep.subr.mxu0 0.0
    %175 = vmatpush1.msra.mxu0 0.0
    %176 = vmatprep.subr.mxu0 0.0
    %177 = vmatpush1.msra.mxu0 0.0
    %178 = vmatprep.subr.mxu0 0.0
    %179 = vmatpush1.msra.mxu0 0.0
    %180 = vmatprep.subr.mxu0 0.0
    %181 = vmatpush1.msra.mxu0 0.0
    %182 = vmatprep.subr.mxu0 0.0
    %183 = vmatpush1.msra.mxu0 0.0
    %184 = vmatprep.subr.mxu0 0.0
    %185 = vmatpush1.msra.mxu0 0.0
    %186 = vmatprep.subr.mxu0 0.0
    %187 = vmatpush1.msra.mxu0 0.0
    %188 = vmatprep.subr.mxu0 0.0
    %189 = vmatpush1.msra.mxu0 0.0
    %190 = vmatprep.subr.mxu0 0.0
    %191 = vmatpush1.msra.mxu0 0.0
    %192 = vmatprep.mubr.f32.mxu0 0.0
    %v193 = vand.u32 %v27, 4294901760
    %v194 = vsub.f32 %v27, %v193
    %v195 = vand.u32 %v194, 4294901760
    %v196 = vsub.f32 %v194, %v195
    %v197 = vand.u32 %v196, 4294901760
    %198 = vmatmul.mubr.f32.gmra.mrb[0].mxu0 %v197
    %v199 = vpop.f32.mrb[0].mxu0
    %v200 = vadd.f32 0.0, %v199
    %v201 = vpop.f32.mrb[0].mxu0
    %202 = vdwg.mxu0
    %203 = vmatprep.subr.mxu0 0.0
    %v204 = vand.u32 %v96, 4294901760
    %v205 = vsub.f32 %v96, %v204
    %v206 = vand.u32 %v205, 4294901760
    %v207 = vsub.f32 %v205, %v206
    %v208 = vand.u32 %v207, 4294901760
    %209 = vmatpush1.msra.mxu0 %v208
    %210 = vmatprep.subr.mxu0 0.0
    %v211 = vand.u32 %v97, 4294901760
    %v212 = vsub.f32 %v97, %v211
    %v213 = vand.u32 %v212, 4294901760
    %v214 = vsub.f32 %v212, %v213
    %v215 = vand.u32 %v214, 4294901760
    %216 = vmatpush1.msra.mxu0 %v215
    %217 = vmatprep.subr.mxu0 0.0
    %v218 = vand.u32 %v98, 4294901760
    %v219 = vsub.f32 %v98, %v218
    %v220 = vand.u32 %v219, 4294901760
    %v221 = vsub.f32 %v219, %v220
    %v222 = vand.u32 %v221, 4294901760
    %223 = vmatpush1.msra.mxu0 %v222
    %224 = vmatprep.subr.mxu0 0.0
    %v225 = vand.u32 %v99, 4294901760
    %v226 = vsub.f32 %v99, %v225
    %v227 = vand.u32 %v226, 4294901760
    %v228 = vsub.f32 %v226, %v227
    %v229 = vand.u32 %v228, 4294901760
    %230 = vmatpush1.msra.mxu0 %v229
    %231 = vmatprep.subr.mxu0 0.0
    %v232 = vand.u32 %v100, 4294901760
    %v233 = vsub.f32 %v100, %v232
    %v234 = vand.u32 %v233, 4294901760
    %v235 = vsub.f32 %v233, %v234
    %v236 = vand.u32 %v235, 4294901760
    %237 = vmatpush1.msra.mxu0 %v236
    %238 = vmatprep.subr.mxu0 0.0
    %v239 = vand.u32 %v101, 4294901760
    %v240 = vsub.f32 %v101, %v239
    %v241 = vand.u32 %v240, 4294901760
    %v242 = vsub.f32 %v240, %v241
    %v243 = vand.u32 %v242, 4294901760
    %244 = vmatpush1.msra.mxu0 %v243
    %245 = vmatprep.subr.mxu0 0.0
    %v246 = vand.u32 %v102, 4294901760
    %v247 = vsub.f32 %v102, %v246
    %v248 = vand.u32 %v247, 4294901760
    %v249 = vsub.f32 %v247, %v248
    %v250 = vand.u32 %v249, 4294901760
    %251 = vmatpush1.msra.mxu0 %v250
    %252 = vmatprep.subr.mxu0 0.0
    %v253 = vand.u32 %v103, 4294901760
    %v254 = vsub.f32 %v103, %v253
    %v255 = vand.u32 %v254, 4294901760
    %v256 = vsub.f32 %v254, %v255
    %v257 = vand.u32 %v256, 4294901760
    %258 = vmatpush1.msra.mxu0 %v257
    %259 = vmatprep.subr.mxu0 0.0
    %v260 = vand.u32 %v104, 4294901760
    %v261 = vsub.f32 %v104, %v260
    %v262 = vand.u32 %v261, 4294901760
    %v263 = vsub.f32 %v261, %v262
    %v264 = vand.u32 %v263, 4294901760
    %265 = vmatpush1.msra.mxu0 %v264
    %266 = vmatprep.subr.mxu0 0.0
    %v267 = vand.u32 %v105, 4294901760
    %v268 = vsub.f32 %v105, %v267
    %v269 = vand.u32 %v268, 4294901760
    %v270 = vsub.f32 %v268, %v269
    %v271 = vand.u32 %v270, 4294901760
    %272 = vmatpush1.msra.mxu0 %v271
    %273 = vmatprep.subr.mxu0 0.0
    %v274 = vand.u32 %v106, 4294901760
    %v275 = vsub.f32 %v106, %v274
    %v276 = vand.u32 %v275, 4294901760
    %v277 = vsub.f32 %v275, %v276
    %v278 = vand.u32 %v277, 4294901760
    %279 = vmatpush1.msra.mxu0 %v278
    %280 = vmatprep.subr.mxu0 0.0
    %v281 = vand.u32 %v107, 4294901760
    %v282 = vsub.f32 %v107, %v281
    %v283 = vand.u32 %v282, 4294901760
    %v284 = vsub.f32 %v282, %v283
    %v285 = vand.u32 %v284, 4294901760
    %286 = vmatpush1.msra.mxu0 %v285
    %287 = vmatprep.subr.mxu0 0.0
    %v288 = vand.u32 %v108, 4294901760
    %v289 = vsub.f32 %v108, %v288
    %v290 = vand.u32 %v289, 4294901760
    %v291 = vsub.f32 %v289, %v290
    %v292 = vand.u32 %v291, 4294901760
    %293 = vmatpush1.msra.mxu0 %v292
    %294 = vmatprep.subr.mxu0 0.0
    %v295 = vand.u32 %v109, 4294901760
    %v296 = vsub.f32 %v109, %v295
    %v297 = vand.u32 %v296, 4294901760
    %v298 = vsub.f32 %v296, %v297
    %v299 = vand.u32 %v298, 4294901760
    %300 = vmatpush1.msra.mxu0 %v299
    %301 = vmatprep.subr.mxu0 0.0
    %v302 = vand.u32 %v110, 4294901760
    %v303 = vsub.f32 %v110, %v302
    %v304 = vand.u32 %v303, 4294901760
    %v305 = vsub.f32 %v303, %v304
    %v306 = vand.u32 %v305, 4294901760
    %307 = vmatpush1.msra.mxu0 %v306
    %308 = vmatprep.subr.mxu0 0.0
    %v309 = vand.u32 %v111, 4294901760
    %v310 = vsub.f32 %v111, %v309
    %v311 = vand.u32 %v310, 4294901760
    %v312 = vsub.f32 %v310, %v311
    %v313 = vand.u32 %v312, 4294901760
    %314 = vmatpush1.msra.mxu0 %v313
    %315 = vmatprep.subr.mxu0 0.0
    %316 = vmatpush1.msra.mxu0 0.0
    %317 = vmatprep.subr.mxu0 0.0
    %318 = vmatpush1.msra.mxu0 0.0
    %319 = vmatprep.subr.mxu0 0.0
    %320 = vmatpush1.msra.mxu0 0.0
    %321 = vmatprep.subr.mxu0 0.0
    %322 = vmatpush1.msra.mxu0 0.0
    %323 = vmatprep.subr.mxu0 0.0
    %324 = vmatpush1.msra.mxu0 0.0
    %325 = vmatprep.subr.mxu0 0.0
    %326 = vmatpush1.msra.mxu0 0.0
    %327 = vmatprep.subr.mxu0 0.0
    %328 = vmatpush1.msra.mxu0 0.0
    %329 = vmatprep.subr.mxu0 0.0
    %330 = vmatpush1.msra.mxu0 0.0
    %331 = vmatprep.subr.mxu0 0.0
    %332 = vmatpush1.msra.mxu0 0.0
    %333 = vmatprep.subr.mxu0 0.0
    %334 = vmatpush1.msra.mxu0 0.0
    %335 = vmatprep.subr.mxu0 0.0
    %336 = vmatpush1.msra.mxu0 0.0
    %337 = vmatprep.subr.mxu0 0.0
    %338 = vmatpush1.msra.mxu0 0.0
    %339 = vmatprep.subr.mxu0 0.0
    %340 = vmatpush1.msra.mxu0 0.0
    %341 = vmatprep.subr.mxu0 0.0
    %342 = vmatpush1.msra.mxu0 0.0
    %343 = vmatprep.subr.mxu0 0.0
    %344 = vmatpush1.msra.mxu0 0.0
    %345 = vmatprep.subr.mxu0 0.0
    %346 = vmatpush1.msra.mxu0 0.0
    %347 = vmatprep.mubr.f32.mxu0 0.0
    %v348 = vand.u32 %v27, 4294901760
    %349 = vmatmul.mubr.f32.gmra.mrb[0].mxu0 %v348
    %v350 = vpop.f32.mrb[0].mxu0
    %v351 = vadd.f32 %v200, %v350
    %v352 = vpop.f32.mrb[0].mxu0
    %353 = vdwg.mxu0
    %354 = vmatprep.subr.mxu0 0.0
    %v355 = vand.u32 %v96, 4294901760
    %v356 = vsub.f32 %v96, %v355
    %357 = vmatpush1.msra.mxu0 %v356
    %358 = vmatprep.subr.mxu0 0.0
    %v359 = vand.u32 %v97, 4294901760
    %v360 = vsub.f32 %v97, %v359
    %361 = vmatpush1.msra.mxu0 %v360
    %362 = vmatprep.subr.mxu0 0.0
    %v363 = vand.u32 %v98, 4294901760
    %v364 = vsub.f32 %v98, %v363
    %365 = vmatpush1.msra.mxu0 %v364
    %366 = vmatprep.subr.mxu0 0.0
    %v367 = vand.u32 %v99, 4294901760
    %v368 = vsub.f32 %v99, %v367
    %369 = vmatpush1.msra.mxu0 %v368
    %370 = vmatprep.subr.mxu0 0.0
    %v371 = vand.u32 %v100, 4294901760
    %v372 = vsub.f32 %v100, %v371
    %373 = vmatpush1.msra.mxu0 %v372
    %374 = vmatprep.subr.mxu0 0.0
    %v375 = vand.u32 %v101, 4294901760
    %v376 = vsub.f32 %v101, %v375
    %377 = vmatpush1.msra.mxu0 %v376
    %378 = vmatprep.subr.mxu0 0.0
    %v379 = vand.u32 %v102, 4294901760
    %v380 = vsub.f32 %v102, %v379
    %381 = vmatpush1.msra.mxu0 %v380
    %382 = vmatprep.subr.mxu0 0.0
    %v383 = vand.u32 %v103, 4294901760
    %v384 = vsub.f32 %v103, %v383
    %385 = vmatpush1.msra.mxu0 %v384
    %386 = vmatprep.subr.mxu0 0.0
    %v387 = vand.u32 %v104, 4294901760
    %v388 = vsub.f32 %v104, %v387
    %389 = vmatpush1.msra.mxu0 %v388
    %390 = vmatprep.subr.mxu0 0.0
    %v391 = vand.u32 %v105, 4294901760
    %v392 = vsub.f32 %v105, %v391
    %393 = vmatpush1.msra.mxu0 %v392
    %394 = vmatprep.subr.mxu0 0.0
    %v395 = vand.u32 %v106, 4294901760
    %v396 = vsub.f32 %v106, %v395
    %397 = vmatpush1.msra.mxu0 %v396
    %398 = vmatprep.subr.mxu0 0.0
    %v399 = vand.u32 %v107, 4294901760
    %v400 = vsub.f32 %v107, %v399
    %401 = vmatpush1.msra.mxu0 %v400
    %402 = vmatprep.subr.mxu0 0.0
    %v403 = vand.u32 %v108, 4294901760
    %v404 = vsub.f32 %v108, %v403
    %405 = vmatpush1.msra.mxu0 %v404
    %406 = vmatprep.subr.mxu0 0.0
    %v407 = vand.u32 %v109, 4294901760
    %v408 = vsub.f32 %v109, %v407
    %409 = vmatpush1.msra.mxu0 %v408
    %410 = vmatprep.subr.mxu0 0.0
    %v411 = vand.u32 %v110, 4294901760
    %v412 = vsub.f32 %v110, %v411
    %413 = vmatpush1.msra.mxu0 %v412
    %414 = vmatprep.subr.mxu0 0.0
    %v415 = vand.u32 %v111, 4294901760
    %v416 = vsub.f32 %v111, %v415
    %417 = vmatpush1.msra.mxu0 %v416
    %418 = vmatprep.subr.mxu0 0.0
    %419 = vmatpush1.msra.mxu0 0.0
    %420 = vmatprep.subr.mxu0 0.0
    %421 = vmatpush1.msra.mxu0 0.0
    %422 = vmatprep.subr.mxu0 0.0
    %423 = vmatpush1.msra.mxu0 0.0
    %424 = vmatprep.subr.mxu0 0.0
    %425 = vmatpush1.msra.mxu0 0.0
    %426 = vmatprep.subr.mxu0 0.0
    %427 = vmatpush1.msra.mxu0 0.0
    %428 = vmatprep.subr.mxu0 0.0
    %429 = vmatpush1.msra.mxu0 0.0
    %430 = vmatprep.subr.mxu0 0.0
    %431 = vmatpush1.msra.mxu0 0.0
    %432 = vmatprep.subr.mxu0 0.0
    %433 = vmatpush1.msra.mxu0 0.0
    %434 = vmatprep.subr.mxu0 0.0
    %435 = vmatpush1.msra.mxu0 0.0
    %436 = vmatprep.subr.mxu0 0.0
    %437 = vmatpush1.msra.mxu0 0.0
    %438 = vmatprep.subr.mxu0 0.0
    %439 = vmatpush1.msra.mxu0 0.0
    %440 = vmatprep.subr.mxu0 0.0
    %441 = vmatpush1.msra.mxu0 0.0
    %442 = vmatprep.subr.mxu0 0.0
    %443 = vmatpush1.msra.mxu0 0.0
    %444 = vmatprep.subr.mxu0 0.0
    %445 = vmatpush1.msra.mxu0 0.0
    %446 = vmatprep.subr.mxu0 0.0
    %447 = vmatpush1.msra.mxu0 0.0
    %448 = vmatprep.subr.mxu0 0.0
    %449 = vmatpush1.msra.mxu0 0.0
    %450 = vmatprep.mubr.f32.mxu0 0.0
    %v451 = vand.u32 %v27, 4294901760
    %v452 = vsub.f32 %v27, %v451
    %453 = vmatmul.mubr.f32.gmra.mrb[0].mxu0 %v452
    %v454 = vpop.f32.mrb[0].mxu0
    %v455 = vadd.f32 %v351, %v454
    %v456 = vpop.f32.mrb[0].mxu0
    %457 = vdwg.mxu0
    %458 = vmatprep.subr.mxu0 0.0
    %v459 = vand.u32 %v96, 4294901760
    %460 = vmatpush1.msra.mxu0 %v459
    %461 = vmatprep.subr.mxu0 0.0
    %v462 = vand.u32 %v97, 4294901760
    %463 = vmatpush1.msra.mxu0 %v462
    %464 = vmatprep.subr.mxu0 0.0
    %v465 = vand.u32 %v98, 4294901760
    %466 = vmatpush1.msra.mxu0 %v465
    %467 = vmatprep.subr.mxu0 0.0
    %v468 = vand.u32 %v99, 4294901760
    %469 = vmatpush1.msra.mxu0 %v468
    %470 = vmatprep.subr.mxu0 0.0
    %v471 = vand.u32 %v100, 4294901760
    %472 = vmatpush1.msra.mxu0 %v471
    %473 = vmatprep.subr.mxu0 0.0
    %v474 = vand.u32 %v101, 4294901760
    %475 = vmatpush1.msra.mxu0 %v474
    %476 = vmatprep.subr.mxu0 0.0
    %v477 = vand.u32 %v102, 4294901760
    %478 = vmatpush1.msra.mxu0 %v477
    %479 = vmatprep.subr.mxu0 0.0
    %v480 = vand.u32 %v103, 4294901760
    %481 = vmatpush1.msra.mxu0 %v480
    %482 = vmatprep.subr.mxu0 0.0
    %v483 = vand.u32 %v104, 4294901760
    %484 = vmatpush1.msra.mxu0 %v483
    %485 = vmatprep.subr.mxu0 0.0
    %v486 = vand.u32 %v105, 4294901760
    %487 = vmatpush1.msra.mxu0 %v486
    %488 = vmatprep.subr.mxu0 0.0
    %v489 = vand.u32 %v106, 4294901760
    %490 = vmatpush1.msra.mxu0 %v489
    %491 = vmatprep.subr.mxu0 0.0
    %v492 = vand.u32 %v107, 4294901760
    %493 = vmatpush1.msra.mxu0 %v492
    %494 = vmatprep.subr.mxu0 0.0
    %v495 = vand.u32 %v108, 4294901760
    %496 = vmatpush1.msra.mxu0 %v495
    %497 = vmatprep.subr.mxu0 0.0
    %v498 = vand.u32 %v109, 4294901760
    %499 = vmatpush1.msra.mxu0 %v498
    %500 = vmatprep.subr.mxu0 0.0
    %v501 = vand.u32 %v110, 4294901760
    %502 = vmatpush1.msra.mxu0 %v501
    %503 = vmatprep.subr.mxu0 0.0
    %v504 = vand.u32 %v111, 4294901760
    %505 = vmatpush1.msra.mxu0 %v504
    %506 = vmatprep.subr.mxu0 0.0
    %507 = vmatpush1.msra.mxu0 0.0
    %508 = vmatprep.subr.mxu0 0.0
    %509 = vmatpush1.msra.mxu0 0.0
    %510 = vmatprep.subr.mxu0 0.0
    %511 = vmatpush1.msra.mxu0 0.0
    %512 = vmatprep.subr.mxu0 0.0
    %513 = vmatpush1.msra.mxu0 0.0
    %514 = vmatprep.subr.mxu0 0.0
    %515 = vmatpush1.msra.mxu0 0.0
    %516 = vmatprep.subr.mxu0 0.0
    %517 = vmatpush1.msra.mxu0 0.0
    %518 = vmatprep.subr.mxu0 0.0
    %519 = vmatpush1.msra.mxu0 0.0
    %520 = vmatprep.subr.mxu0 0.0
    %521 = vmatpush1.msra.mxu0 0.0
    %522 = vmatprep.subr.mxu0 0.0
    %523 = vmatpush1.msra.mxu0 0.0
    %524 = vmatprep.subr.mxu0 0.0
    %525 = vmatpush1.msra.mxu0 0.0
    %526 = vmatprep.subr.mxu0 0.0
    %527 = vmatpush1.msra.mxu0 0.0
    %528 = vmatprep.subr.mxu0 0.0
    %529 = vmatpush1.msra.mxu0 0.0
    %530 = vmatprep.subr.mxu0 0.0
    %531 = vmatpush1.msra.mxu0 0.0
    %532 = vmatprep.subr.mxu0 0.0
    %533 = vmatpush1.msra.mxu0 0.0
    %534 = vmatprep.subr.mxu0 0.0
    %535 = vmatpush1.msra.mxu0 0.0
    %536 = vmatprep.subr.mxu0 0.0
    %537 = vmatpush1.msra.mxu0 0.0
    %538 = vmatprep.mubr.f32.mxu0 0.0
    %v539 = vand.u32 %v27, 4294901760
    %v540 = vsub.f32 %v27, %v539
    %v541 = vand.u32 %v540, 4294901760
    %542 = vmatmul.mubr.f32.gmra.mrb[0].mxu0 %v541
    %v543 = vpop.f32.mrb[0].mxu0
    %v544 = vadd.f32 %v455, %v543
    %v545 = vpop.f32.mrb[0].mxu0
    %546 = vdwg.mxu0
    %547 = vmatprep.subr.mxu0 0.0
    %v548 = vand.u32 %v96, 4294901760
    %v549 = vsub.f32 %v96, %v548
    %v550 = vand.u32 %v549, 4294901760
    %551 = vmatpush1.msra.mxu0 %v550
    %552 = vmatprep.subr.mxu0 0.0
    %v553 = vand.u32 %v97, 4294901760
    %v554 = vsub.f32 %v97, %v553
    %v555 = vand.u32 %v554, 4294901760
    %556 = vmatpush1.msra.mxu0 %v555
    %557 = vmatprep.subr.mxu0 0.0
    %v558 = vand.u32 %v98, 4294901760
    %v559 = vsub.f32 %v98, %v558
    %v560 = vand.u32 %v559, 4294901760
    %561 = vmatpush1.msra.mxu0 %v560
    %562 = vmatprep.subr.mxu0 0.0
    %v563 = vand.u32 %v99, 4294901760
    %v564 = vsub.f32 %v99, %v563
    %v565 = vand.u32 %v564, 4294901760
    %566 = vmatpush1.msra.mxu0 %v565
    %567 = vmatprep.subr.mxu0 0.0
    %v568 = vand.u32 %v100, 4294901760
    %v569 = vsub.f32 %v100, %v568
    %v570 = vand.u32 %v569, 4294901760
    %571 = vmatpush1.msra.mxu0 %v570
    %572 = vmatprep.subr.mxu0 0.0
    %v573 = vand.u32 %v101, 4294901760
    %v574 = vsub.f32 %v101, %v573
    %v575 = vand.u32 %v574, 4294901760
    %576 = vmatpush1.msra.mxu0 %v575
    %577 = vmatprep.subr.mxu0 0.0
    %v578 = vand.u32 %v102, 4294901760
    %v579 = vsub.f32 %v102, %v578
    %v580 = vand.u32 %v579, 4294901760
    %581 = vmatpush1.msra.mxu0 %v580
    %582 = vmatprep.subr.mxu0 0.0
    %v583 = vand.u32 %v103, 4294901760
    %v584 = vsub.f32 %v103, %v583
    %v585 = vand.u32 %v584, 4294901760
    %586 = vmatpush1.msra.mxu0 %v585
    %587 = vmatprep.subr.mxu0 0.0
    %v588 = vand.u32 %v104, 4294901760
    %v589 = vsub.f32 %v104, %v588
    %v590 = vand.u32 %v589, 4294901760
    %591 = vmatpush1.msra.mxu0 %v590
    %592 = vmatprep.subr.mxu0 0.0
    %v593 = vand.u32 %v105, 4294901760
    %v594 = vsub.f32 %v105, %v593
    %v595 = vand.u32 %v594, 4294901760
    %596 = vmatpush1.msra.mxu0 %v595
    %597 = vmatprep.subr.mxu0 0.0
    %v598 = vand.u32 %v106, 4294901760
    %v599 = vsub.f32 %v106, %v598
    %v600 = vand.u32 %v599, 4294901760
    %601 = vmatpush1.msra.mxu0 %v600
    %602 = vmatprep.subr.mxu0 0.0
    %v603 = vand.u32 %v107, 4294901760
    %v604 = vsub.f32 %v107, %v603
    %v605 = vand.u32 %v604, 4294901760
    %606 = vmatpush1.msra.mxu0 %v605
    %607 = vmatprep.subr.mxu0 0.0
    %v608 = vand.u32 %v108, 4294901760
    %v609 = vsub.f32 %v108, %v608
    %v610 = vand.u32 %v609, 4294901760
    %611 = vmatpush1.msra.mxu0 %v610
    %612 = vmatprep.subr.mxu0 0.0
    %v613 = vand.u32 %v109, 4294901760
    %v614 = vsub.f32 %v109, %v613
    %v615 = vand.u32 %v614, 4294901760
    %616 = vmatpush1.msra.mxu0 %v615
    %617 = vmatprep.subr.mxu0 0.0
    %v618 = vand.u32 %v110, 4294901760
    %v619 = vsub.f32 %v110, %v618
    %v620 = vand.u32 %v619, 4294901760
    %621 = vmatpush1.msra.mxu0 %v620
    %622 = vmatprep.subr.mxu0 0.0
    %v623 = vand.u32 %v111, 4294901760
    %v624 = vsub.f32 %v111, %v623
    %v625 = vand.u32 %v624, 4294901760
    %626 = vmatpush1.msra.mxu0 %v625
    %627 = vmatprep.subr.mxu0 0.0
    %628 = vmatpush1.msra.mxu0 0.0
    %629 = vmatprep.subr.mxu0 0.0
    %630 = vmatpush1.msra.mxu0 0.0
    %631 = vmatprep.subr.mxu0 0.0
    %632 = vmatpush1.msra.mxu0 0.0
    %633 = vmatprep.subr.mxu0 0.0
    %634 = vmatpush1.msra.mxu0 0.0
    %635 = vmatprep.subr.mxu0 0.0
    %636 = vmatpush1.msra.mxu0 0.0
    %637 = vmatprep.subr.mxu0 0.0
    %638 = vmatpush1.msra.mxu0 0.0
    %639 = vmatprep.subr.mxu0 0.0
    %640 = vmatpush1.msra.mxu0 0.0
    %641 = vmatprep.subr.mxu0 0.0
    %642 = vmatpush1.msra.mxu0 0.0
    %643 = vmatprep.subr.mxu0 0.0
    %644 = vmatpush1.msra.mxu0 0.0
    %645 = vmatprep.subr.mxu0 0.0
    %646 = vmatpush1.msra.mxu0 0.0
    %647 = vmatprep.subr.mxu0 0.0
    %648 = vmatpush1.msra.mxu0 0.0
    %649 = vmatprep.subr.mxu0 0.0
    %650 = vmatpush1.msra.mxu0 0.0
    %651 = vmatprep.subr.mxu0 0.0
    %652 = vmatpush1.msra.mxu0 0.0
    %653 = vmatprep.subr.mxu0 0.0
    %654 = vmatpush1.msra.mxu0 0.0
    %655 = vmatprep.subr.mxu0 0.0
    %656 = vmatpush1.msra.mxu0 0.0
    %657 = vmatprep.subr.mxu0 0.0
    %658 = vmatpush1.msra.mxu0 0.0
    %659 = vmatprep.mubr.f32.mxu0 0.0
    %v660 = vand.u32 %v27, 4294901760
    %661 = vmatmul.mubr.f32.gmra.mrb[0].mxu0 %v660
    %v662 = vpop.f32.mrb[0].mxu0
    %v663 = vadd.f32 %v544, %v662
    %v664 = vpop.f32.mrb[0].mxu0
    %665 = vdwg.mxu0
    %666 = vmatprep.subr.mxu0 0.0
    %v667 = vand.u32 %v96, 4294901760
    %668 = vmatpush1.msra.mxu0 %v667
    %669 = vmatprep.subr.mxu0 0.0
    %v670 = vand.u32 %v97, 4294901760
    %671 = vmatpush1.msra.mxu0 %v670
    %672 = vmatprep.subr.mxu0 0.0
    %v673 = vand.u32 %v98, 4294901760
    %674 = vmatpush1.msra.mxu0 %v673
    %675 = vmatprep.subr.mxu0 0.0
    %v676 = vand.u32 %v99, 4294901760
    %677 = vmatpush1.msra.mxu0 %v676
    %678 = vmatprep.subr.mxu0 0.0
    %v679 = vand.u32 %v100, 4294901760
    %680 = vmatpush1.msra.mxu0 %v679
    %681 = vmatprep.subr.mxu0 0.0
    %v682 = vand.u32 %v101, 4294901760
    %683 = vmatpush1.msra.mxu0 %v682
    %684 = vmatprep.subr.mxu0 0.0
    %v685 = vand.u32 %v102, 4294901760
    %686 = vmatpush1.msra.mxu0 %v685
    %687 = vmatprep.subr.mxu0 0.0
    %v688 = vand.u32 %v103, 4294901760
    %689 = vmatpush1.msra.mxu0 %v688
    %690 = vmatprep.subr.mxu0 0.0
    %v691 = vand.u32 %v104, 4294901760
    %692 = vmatpush1.msra.mxu0 %v691
    %693 = vmatprep.subr.mxu0 0.0
    %v694 = vand.u32 %v105, 4294901760
    %695 = vmatpush1.msra.mxu0 %v694
    %696 = vmatprep.subr.mxu0 0.0
    %v697 = vand.u32 %v106, 4294901760
    %698 = vmatpush1.msra.mxu0 %v697
    %699 = vmatprep.subr.mxu0 0.0
    %v700 = vand.u32 %v107, 4294901760
    %701 = vmatpush1.msra.mxu0 %v700
    %702 = vmatprep.subr.mxu0 0.0
    %v703 = vand.u32 %v108, 4294901760
    %704 = vmatpush1.msra.mxu0 %v703
    %705 = vmatprep.subr.mxu0 0.0
    %v706 = vand.u32 %v109, 4294901760
    %707 = vmatpush1.msra.mxu0 %v706
    %708 = vmatprep.subr.mxu0 0.0
    %v709 = vand.u32 %v110, 4294901760
    %710 = vmatpush1.msra.mxu0 %v709
    %711 = vmatprep.subr.mxu0 0.0
    %v712 = vand.u32 %v111, 4294901760
    %713 = vmatpush1.msra.mxu0 %v712
    %714 = vmatprep.subr.mxu0 0.0
    %715 = vmatpush1.msra.mxu0 0.0
    %716 = vmatprep.subr.mxu0 0.0
    %717 = vmatpush1.msra.mxu0 0.0
    %718 = vmatprep.subr.mxu0 0.0
    %719 = vmatpush1.msra.mxu0 0.0
    %720 = vmatprep.subr.mxu0 0.0
    %721 = vmatpush1.msra.mxu0 0.0
    %722 = vmatprep.subr.mxu0 0.0
    %723 = vmatpush1.msra.mxu0 0.0
    %724 = vmatprep.subr.mxu0 0.0
    %725 = vmatpush1.msra.mxu0 0.0
    %726 = vmatprep.subr.mxu0 0.0
    %727 = vmatpush1.msra.mxu0 0.0
    %728 = vmatprep.subr.mxu0 0.0
    %729 = vmatpush1.msra.mxu0 0.0
    %730 = vmatprep.subr.mxu0 0.0
    %731 = vmatpush1.msra.mxu0 0.0
    %732 = vmatprep.subr.mxu0 0.0
    %733 = vmatpush1.msra.mxu0 0.0
    %734 = vmatprep.subr.mxu0 0.0
    %735 = vmatpush1.msra.mxu0 0.0
    %736 = vmatprep.subr.mxu0 0.0
    %737 = vmatpush1.msra.mxu0 0.0
    %738 = vmatprep.subr.mxu0 0.0
    %739 = vmatpush1.msra.mxu0 0.0
    %740 = vmatprep.subr.mxu0 0.0
    %741 = vmatpush1.msra.mxu0 0.0
    %742 = vmatprep.subr.mxu0 0.0
    %743 = vmatpush1.msra.mxu0 0.0
    %744 = vmatprep.subr.mxu0 0.0
    %745 = vmatpush1.msra.mxu0 0.0
    %746 = vmatprep.mubr.f32.mxu0 0.0
    %v747 = vand.u32 %v27, 4294901760
    %748 = vmatmul.mubr.f32.gmra.mrb[0].mxu0 %v747
    %v749 = vpop.f32.mrb[0].mxu0
    %v750 = vadd.f32 %v663, %v749
    %v751 = vpop.f32.mrb[0].mxu0
    %752 = vdwg.mxu0
    %v753 = vmul.f32 %v750, 0.03125
    %v754 = vsub.f32 %v27, %v753
    %v755 = vmul.f32 %v754, %v754
    %756 = vmatprep.subr.mxu0 0.0
    %v757 = vand.u32 %v96, 4294901760
    %758 = vmatpush1.msra.mxu0 %v757
    %759 = vmatprep.subr.mxu0 0.0
    %v760 = vand.u32 %v97, 4294901760
    %761 = vmatpush1.msra.mxu0 %v760
    %762 = vmatprep.subr.mxu0 0.0
    %v763 = vand.u32 %v98, 4294901760
    %764 = vmatpush1.msra.mxu0 %v763
    %765 = vmatprep.subr.mxu0 0.0
    %v766 = vand.u32 %v99, 4294901760
    %767 = vmatpush1.msra.mxu0 %v766
    %768 = vmatprep.subr.mxu0 0.0
    %v769 = vand.u32 %v100, 4294901760
    %770 = vmatpush1.msra.mxu0 %v769
    %771 = vmatprep.subr.mxu0 0.0
    %v772 = vand.u32 %v101, 4294901760
    %773 = vmatpush1.msra.mxu0 %v772
    %774 = vmatprep.subr.mxu0 0.0
    %v775 = vand.u32 %v102, 4294901760
    %776 = vmatpush1.msra.mxu0 %v775
    %777 = vmatprep.subr.mxu0 0.0
    %v778 = vand.u32 %v103, 4294901760
    %779 = vmatpush1.msra.mxu0 %v778
    %780 = vmatprep.subr.mxu0 0.0
    %v781 = vand.u32 %v104, 4294901760
    %782 = vmatpush1.msra.mxu0 %v781
    %783 = vmatprep.subr.mxu0 0.0
    %v784 = vand.u32 %v105, 4294901760
    %785 = vmatpush1.msra.mxu0 %v784
    %786 = vmatprep.subr.mxu0 0.0
    %v787 = vand.u32 %v106, 4294901760
    %788 = vmatpush1.msra.mxu0 %v787
    %789 = vmatprep.subr.mxu0 0.0
    %v790 = vand.u32 %v107, 4294901760
    %791 = vmatpush1.msra.mxu0 %v790
    %792 = vmatprep.subr.mxu0 0.0
    %v793 = vand.u32 %v108, 4294901760
    %794 = vmatpush1.msra.mxu0 %v793
    %795 = vmatprep.subr.mxu0 0.0
    %v796 = vand.u32 %v109, 4294901760
    %797 = vmatpush1.msra.mxu0 %v796
    %798 = vmatprep.subr.mxu0 0.0
    %v799 = vand.u32 %v110, 4294901760
    %800 = vmatpush1.msra.mxu0 %v799
    %801 = vmatprep.subr.mxu0 0.0
    %v802 = vand.u32 %v111, 4294901760
    %803 = vmatpush1.msra.mxu0 %v802
    %804 = vmatprep.subr.mxu0 0.0
    %805 = vmatpush1.msra.mxu0 0.0
    %806 = vmatprep.subr.mxu0 0.0
    %807 = vmatpush1.msra.mxu0 0.0
    %808 = vmatprep.subr.mxu0 0.0
    %809 = vmatpush1.msra.mxu0 0.0
    %810 = vmatprep.subr.mxu0 0.0
    %811 = vmatpush1.msra.mxu0 0.0
    %812 = vmatprep.subr.mxu0 0.0
    %813 = vmatpush1.msra.mxu0 0.0
    %814 = vmatprep.subr.mxu0 0.0
    %815 = vmatpush1.msra.mxu0 0.0
    %816 = vmatprep.subr.mxu0 0.0
    %817 = vmatpush1.msra.mxu0 0.0
    %818 = vmatprep.subr.mxu0 0.0
    %819 = vmatpush1.msra.mxu0 0.0
    %820 = vmatprep.subr.mxu0 0.0
    %821 = vmatpush1.msra.mxu0 0.0
    %822 = vmatprep.subr.mxu0 0.0
    %823 = vmatpush1.msra.mxu0 0.0
    %824 = vmatprep.subr.mxu0 0.0
    %825 = vmatpush1.msra.mxu0 0.0
    %826 = vmatprep.subr.mxu0 0.0
    %827 = vmatpush1.msra.mxu0 0.0
    %828 = vmatprep.subr.mxu0 0.0
    %829 = vmatpush1.msra.mxu0 0.0
    %830 = vmatprep.subr.mxu0 0.0
    %831 = vmatpush1.msra.mxu0 0.0
    %832 = vmatprep.subr.mxu0 0.0
    %833 = vmatpush1.msra.mxu0 0.0
    %834 = vmatprep.subr.mxu0 0.0
    %835 = vmatpush1.msra.mxu0 0.0
    %836 = vmatprep.mubr.f32.mxu0 0.0
    %v837 = vand.u32 %v755, 4294901760
    %v838 = vsub.f32 %v755, %v837
    %v839 = vand.u32 %v838, 4294901760
    %v840 = vsub.f32 %v838, %v839
    %v841 = vand.u32 %v840, 4294901760
    %842 = vmatmul.mubr.f32.gmra.mrb[0].mxu0 %v841
    %v843 = vpop.f32.mrb[0].mxu0
    %v844 = vadd.f32 0.0, %v843
    %v845 = vpop.f32.mrb[0].mxu0
    %846 = vdwg.mxu0
    %847 = vmatprep.subr.mxu0 0.0
    %v848 = vand.u32 %v96, 4294901760
    %v849 = vsub.f32 %v96, %v848
    %v850 = vand.u32 %v849, 4294901760
    %v851 = vsub.f32 %v849, %v850
    %v852 = vand.u32 %v851, 4294901760
    %853 = vmatpush1.msra.mxu0 %v852
    %854 = vmatprep.subr.mxu0 0.0
    %v855 = vand.u32 %v97, 4294901760
    %v856 = vsub.f32 %v97, %v855
    %v857 = vand.u32 %v856, 4294901760
    %v858 = vsub.f32 %v856, %v857
    %v859 = vand.u32 %v858, 4294901760
    %860 = vmatpush1.msra.mxu0 %v859
    %861 = vmatprep.subr.mxu0 0.0
    %v862 = vand.u32 %v98, 4294901760
    %v863 = vsub.f32 %v98, %v862
    %v864 = vand.u32 %v863, 4294901760
    %v865 = vsub.f32 %v863, %v864
    %v866 = vand.u32 %v865, 4294901760
    %867 = vmatpush1.msra.mxu0 %v866
    %868 = vmatprep.subr.mxu0 0.0
    %v869 = vand.u32 %v99, 4294901760
    %v870 = vsub.f32 %v99, %v869
    %v871 = vand.u32 %v870, 4294901760
    %v872 = vsub.f32 %v870, %v871
    %v873 = vand.u32 %v872, 4294901760
    %874 = vmatpush1.msra.mxu0 %v873
    %875 = vmatprep.subr.mxu0 0.0
    %v876 = vand.u32 %v100, 4294901760
    %v877 = vsub.f32 %v100, %v876
    %v878 = vand.u32 %v877, 4294901760
    %v879 = vsub.f32 %v877, %v878
    %v880 = vand.u32 %v879, 4294901760
    %881 = vmatpush1.msra.mxu0 %v880
    %882 = vmatprep.subr.mxu0 0.0
    %v883 = vand.u32 %v101, 4294901760
    %v884 = vsub.f32 %v101, %v883
    %v885 = vand.u32 %v884, 4294901760
    %v886 = vsub.f32 %v884, %v885
    %v887 = vand.u32 %v886, 4294901760
    %888 = vmatpush1.msra.mxu0 %v887
    %889 = vmatprep.subr.mxu0 0.0
    %v890 = vand.u32 %v102, 4294901760
    %v891 = vsub.f32 %v102, %v890
    %v892 = vand.u32 %v891, 4294901760
    %v893 = vsub.f32 %v891, %v892
    %v894 = vand.u32 %v893, 4294901760
    %895 = vmatpush1.msra.mxu0 %v894
    %896 = vmatprep.subr.mxu0 0.0
    %v897 = vand.u32 %v103, 4294901760
    %v898 = vsub.f32 %v103, %v897
    %v899 = vand.u32 %v898, 4294901760
    %v900 = vsub.f32 %v898, %v899
    %v901 = vand.u32 %v900, 4294901760
    %902 = vmatpush1.msra.mxu0 %v901
    %903 = vmatprep.subr.mxu0 0.0
    %v904 = vand.u32 %v104, 4294901760
    %v905 = vsub.f32 %v104, %v904
    %v906 = vand.u32 %v905, 4294901760
    %v907 = vsub.f32 %v905, %v906
    %v908 = vand.u32 %v907, 4294901760
    %909 = vmatpush1.msra.mxu0 %v908
    %910 = vmatprep.subr.mxu0 0.0
    %v911 = vand.u32 %v105, 4294901760
    %v912 = vsub.f32 %v105, %v911
    %v913 = vand.u32 %v912, 4294901760
    %v914 = vsub.f32 %v912, %v913
    %v915 = vand.u32 %v914, 4294901760
    %916 = vmatpush1.msra.mxu0 %v915
    %917 = vmatprep.subr.mxu0 0.0
    %v918 = vand.u32 %v106, 4294901760
    %v919 = vsub.f32 %v106, %v918
    %v920 = vand.u32 %v919, 4294901760
    %v921 = vsub.f32 %v919, %v920
    %v922 = vand.u32 %v921, 4294901760
    %923 = vmatpush1.msra.mxu0 %v922
    %924 = vmatprep.subr.mxu0 0.0
    %v925 = vand.u32 %v107, 4294901760
    %v926 = vsub.f32 %v107, %v925
    %v927 = vand.u32 %v926, 4294901760
    %v928 = vsub.f32 %v926, %v927
    %v929 = vand.u32 %v928, 4294901760
    %930 = vmatpush1.msra.mxu0 %v929
    %931 = vmatprep.subr.mxu0 0.0
    %v932 = vand.u32 %v108, 4294901760
    %v933 = vsub.f32 %v108, %v932
    %v934 = vand.u32 %v933, 4294901760
    %v935 = vsub.f32 %v933, %v934
    %v936 = vand.u32 %v935, 4294901760
    %937 = vmatpush1.msra.mxu0 %v936
    %938 = vmatprep.subr.mxu0 0.0
    %v939 = vand.u32 %v109, 4294901760
    %v940 = vsub.f32 %v109, %v939
    %v941 = vand.u32 %v940, 4294901760
    %v942 = vsub.f32 %v940, %v941
    %v943 = vand.u32 %v942, 4294901760
    %944 = vmatpush1.msra.mxu0 %v943
    %945 = vmatprep.subr.mxu0 0.0
    %v946 = vand.u32 %v110, 4294901760
    %v947 = vsub.f32 %v110, %v946
    %v948 = vand.u32 %v947, 4294901760
    %v949 = vsub.f32 %v947, %v948
    %v950 = vand.u32 %v949, 4294901760
    %951 = vmatpush1.msra.mxu0 %v950
    %952 = vmatprep.subr.mxu0 0.0
    %v953 = vand.u32 %v111, 4294901760
    %v954 = vsub.f32 %v111, %v953
    %v955 = vand.u32 %v954, 4294901760
    %v956 = vsub.f32 %v954, %v955
    %v957 = vand.u32 %v956, 4294901760
    %958 = vmatpush1.msra.mxu0 %v957
    %959 = vmatprep.subr.mxu0 0.0
    %960 = vmatpush1.msra.mxu0 0.0
    %961 = vmatprep.subr.mxu0 0.0
    %962 = vmatpush1.msra.mxu0 0.0
    %963 = vmatprep.subr.mxu0 0.0
    %964 = vmatpush1.msra.mxu0 0.0
    %965 = vmatprep.subr.mxu0 0.0
    %966 = vmatpush1.msra.mxu0 0.0
    %967 = vmatprep.subr.mxu0 0.0
    %968 = vmatpush1.msra.mxu0 0.0
    %969 = vmatprep.subr.mxu0 0.0
    %970 = vmatpush1.msra.mxu0 0.0
    %971 = vmatprep.subr.mxu0 0.0
    %972 = vmatpush1.msra.mxu0 0.0
    %973 = vmatprep.subr.mxu0 0.0
    %974 = vmatpush1.msra.mxu0 0.0
    %975 = vmatprep.subr.mxu0 0.0
    %976 = vmatpush1.msra.mxu0 0.0
    %977 = vmatprep.subr.mxu0 0.0
    %978 = vmatpush1.msra.mxu0 0.0
    %979 = vmatprep.subr.mxu0 0.0
    %980 = vmatpush1.msra.mxu0 0.0
    %981 = vmatprep.subr.mxu0 0.0
    %982 = vmatpush1.msra.mxu0 0.0
    %983 = vmatprep.subr.mxu0 0.0
    %984 = vmatpush1.msra.mxu0 0.0
    %985 = vmatprep.subr.mxu0 0.0
    %986 = vmatpush1.msra.mxu0 0.0
    %987 = vmatprep.subr.mxu0 0.0
    %988 = vmatpush1.msra.mxu0 0.0
    %989 = vmatprep.subr.mxu0 0.0
    %990 = vmatpush1.msra.mxu0 0.0
    %991 = vmatprep.mubr.f32.mxu0 0.0
    %v992 = vand.u32 %v755, 4294901760
    %993 = vmatmul.mubr.f32.gmra.mrb[0].mxu0 %v992
    %v994 = vpop.f32.mrb[0].mxu0
    %v995 = vadd.f32 %v844, %v994
    %v996 = vpop.f32.mrb[0].mxu0
    %997 = vdwg.mxu0
    %998 = vmatprep.subr.mxu0 0.0
    %v999 = vand.u32 %v96, 4294901760
    %v1000 = vsub.f32 %v96, %v999
    %1001 = vmatpush1.msra.mxu0 %v1000
    %1002 = vmatprep.subr.mxu0 0.0
    %v1003 = vand.u32 %v97, 4294901760
    %v1004 = vsub.f32 %v97, %v1003
    %1005 = vmatpush1.msra.mxu0 %v1004
    %1006 = vmatprep.subr.mxu0 0.0
    %v1007 = vand.u32 %v98, 4294901760
    %v1008 = vsub.f32 %v98, %v1007
    %1009 = vmatpush1.msra.mxu0 %v1008
    %1010 = vmatprep.subr.mxu0 0.0
    %v1011 = vand.u32 %v99, 4294901760
    %v1012 = vsub.f32 %v99, %v1011
    %1013 = vmatpush1.msra.mxu0 %v1012
    %1014 = vmatprep.subr.mxu0 0.0
    %v1015 = vand.u32 %v100, 4294901760
    %v1016 = vsub.f32 %v100, %v1015
    %1017 = vmatpush1.msra.mxu0 %v1016
    %1018 = vmatprep.subr.mxu0 0.0
    %v1019 = vand.u32 %v101, 4294901760
    %v1020 = vsub.f32 %v101, %v1019
    %1021 = vmatpush1.msra.mxu0 %v1020
    %1022 = vmatprep.subr.mxu0 0.0
    %v1023 = vand.u32 %v102, 4294901760
    %v1024 = vsub.f32 %v102, %v1023
    %1025 = vmatpush1.msra.mxu0 %v1024
    %1026 = vmatprep.subr.mxu0 0.0
    %v1027 = vand.u32 %v103, 4294901760
    %v1028 = vsub.f32 %v103, %v1027
    %1029 = vmatpush1.msra.mxu0 %v1028
    %1030 = vmatprep.subr.mxu0 0.0
    %v1031 = vand.u32 %v104, 4294901760
    %v1032 = vsub.f32 %v104, %v1031
    %1033 = vmatpush1.msra.mxu0 %v1032
    %1034 = vmatprep.subr.mxu0 0.0
    %v1035 = vand.u32 %v105, 4294901760
    %v1036 = vsub.f32 %v105, %v1035
    %1037 = vmatpush1.msra.mxu0 %v1036
    %1038 = vmatprep.subr.mxu0 0.0
    %v1039 = vand.u32 %v106, 4294901760
    %v1040 = vsub.f32 %v106, %v1039
    %1041 = vmatpush1.msra.mxu0 %v1040
    %1042 = vmatprep.subr.mxu0 0.0
    %v1043 = vand.u32 %v107, 4294901760
    %v1044 = vsub.f32 %v107, %v1043
    %1045 = vmatpush1.msra.mxu0 %v1044
    %1046 = vmatprep.subr.mxu0 0.0
    %v1047 = vand.u32 %v108, 4294901760
    %v1048 = vsub.f32 %v108, %v1047
    %1049 = vmatpush1.msra.mxu0 %v1048
    %1050 = vmatprep.subr.mxu0 0.0
    %v1051 = vand.u32 %v109, 4294901760
    %v1052 = vsub.f32 %v109, %v1051
    %1053 = vmatpush1.msra.mxu0 %v1052
    %1054 = vmatprep.subr.mxu0 0.0
    %v1055 = vand.u32 %v110, 4294901760
    %v1056 = vsub.f32 %v110, %v1055
    %1057 = vmatpush1.msra.mxu0 %v1056
    %1058 = vmatprep.subr.mxu0 0.0
    %v1059 = vand.u32 %v111, 4294901760
    %v1060 = vsub.f32 %v111, %v1059
    %1061 = vmatpush1.msra.mxu0 %v1060
    %1062 = vmatprep.subr.mxu0 0.0
    %1063 = vmatpush1.msra.mxu0 0.0
    %1064 = vmatprep.subr.mxu0 0.0
    %1065 = vmatpush1.msra.mxu0 0.0
    %1066 = vmatprep.subr.mxu0 0.0
    %1067 = vmatpush1.msra.mxu0 0.0
    %1068 = vmatprep.subr.mxu0 0.0
    %1069 = vmatpush1.msra.mxu0 0.0
    %1070 = vmatprep.subr.mxu0 0.0
    %1071 = vmatpush1.msra.mxu0 0.0
    %1072 = vmatprep.subr.mxu0 0.0
    %1073 = vmatpush1.msra.mxu0 0.0
    %1074 = vmatprep.subr.mxu0 0.0
    %1075 = vmatpush1.msra.mxu0 0.0
    %1076 = vmatprep.subr.mxu0 0.0
    %1077 = vmatpush1.msra.mxu0 0.0
    %1078 = vmatprep.subr.mxu0 0.0
    %1079 = vmatpush1.msra.mxu0 0.0
    %1080 = vmatprep.subr.mxu0 0.0
    %1081 = vmatpush1.msra.mxu0 0.0
    %1082 = vmatprep.subr.mxu0 0.0
    %1083 = vmatpush1.msra.mxu0 0.0
    %1084 = vmatprep.subr.mxu0 0.0
    %1085 = vmatpush1.msra.mxu0 0.0
    %1086 = vmatprep.subr.mxu0 0.0
    %1087 = vmatpush1.msra.mxu0 0.0
    %1088 = vmatprep.subr.mxu0 0.0
    %1089 = vmatpush1.msra.mxu0 0.0
    %1090 = vmatprep.subr.mxu0 0.0
    %1091 = vmatpush1.msra.mxu0 0.0
    %1092 = vmatprep.subr.mxu0 0.0
    %1093 = vmatpush1.msra.mxu0 0.0
    %1094 = vmatprep.mubr.f32.mxu0 0.0
    %v1095 = vand.u32 %v755, 4294901760
    %v1096 = vsub.f32 %v755, %v1095
    %1097 = vmatmul.mubr.f32.gmra.mrb[0].mxu0 %v1096
    %v1098 = vpop.f32.mrb[0].mxu0
    %v1099 = vadd.f32 %v995, %v1098
    %v1100 = vpop.f32.mrb[0].mxu0
    %1101 = vdwg.mxu0
    %1102 = vmatprep.subr.mxu0 0.0
    %v1103 = vand.u32 %v96, 4294901760
    %1104 = vmatpush1.msra.mxu0 %v1103
    %1105 = vmatprep.subr.mxu0 0.0
    %v1106 = vand.u32 %v97, 4294901760
    %1107 = vmatpush1.msra.mxu0 %v1106
    %1108 = vmatprep.subr.mxu0 0.0
    %v1109 = vand.u32 %v98, 4294901760
    %1110 = vmatpush1.msra.mxu0 %v1109
    %1111 = vmatprep.subr.mxu0 0.0
    %v1112 = vand.u32 %v99, 4294901760
    %1113 = vmatpush1.msra.mxu0 %v1112
    %1114 = vmatprep.subr.mxu0 0.0
    %v1115 = vand.u32 %v100, 4294901760
    %1116 = vmatpush1.msra.mxu0 %v1115
    %1117 = vmatprep.subr.mxu0 0.0
    %v1118 = vand.u32 %v101, 4294901760
    %1119 = vmatpush1.msra.mxu0 %v1118
    %1120 = vmatprep.subr.mxu0 0.0
    %v1121 = vand.u32 %v102, 4294901760
    %1122 = vmatpush1.msra.mxu0 %v1121
    %1123 = vmatprep.subr.mxu0 0.0
    %v1124 = vand.u32 %v103, 4294901760
    %1125 = vmatpush1.msra.mxu0 %v1124
    %1126 = vmatprep.subr.mxu0 0.0
    %v1127 = vand.u32 %v104, 4294901760
    %1128 = vmatpush1.msra.mxu0 %v1127
    %1129 = vmatprep.subr.mxu0 0.0
    %v1130 = vand.u32 %v105, 4294901760
    %1131 = vmatpush1.msra.mxu0 %v1130
    %1132 = vmatprep.subr.mxu0 0.0
    %v1133 = vand.u32 %v106, 4294901760
    %1134 = vmatpush1.msra.mxu0 %v1133
    %1135 = vmatprep.subr.mxu0 0.0
    %v1136 = vand.u32 %v107, 4294901760
    %1137 = vmatpush1.msra.mxu0 %v1136
    %1138 = vmatprep.subr.mxu0 0.0
    %v1139 = vand.u32 %v108, 4294901760
    %1140 = vmatpush1.msra.mxu0 %v1139
    %1141 = vmatprep.subr.mxu0 0.0
    %v1142 = vand.u32 %v109, 4294901760
    %1143 = vmatpush1.msra.mxu0 %v1142
    %1144 = vmatprep.subr.mxu0 0.0
    %v1145 = vand.u32 %v110, 4294901760
    %1146 = vmatpush1.msra.mxu0 %v1145
    %1147 = vmatprep.subr.mxu0 0.0
    %v1148 = vand.u32 %v111, 4294901760
    %1149 = vmatpush1.msra.mxu0 %v1148
    %1150 = vmatprep.subr.mxu0 0.0
    %1151 = vmatpush1.msra.mxu0 0.0
    %1152 = vmatprep.subr.mxu0 0.0
    %1153 = vmatpush1.msra.mxu0 0.0
    %1154 = vmatprep.subr.mxu0 0.0
    %1155 = vmatpush1.msra.mxu0 0.0
    %1156 = vmatprep.subr.mxu0 0.0
    %1157 = vmatpush1.msra.mxu0 0.0
    %1158 = vmatprep.subr.mxu0 0.0
    %1159 = vmatpush1.msra.mxu0 0.0
    %1160 = vmatprep.subr.mxu0 0.0
    %1161 = vmatpush1.msra.mxu0 0.0
    %1162 = vmatprep.subr.mxu0 0.0
    %1163 = vmatpush1.msra.mxu0 0.0
    %1164 = vmatprep.subr.mxu0 0.0
    %1165 = vmatpush1.msra.mxu0 0.0
    %1166 = vmatprep.subr.mxu0 0.0
    %1167 = vmatpush1.msra.mxu0 0.0
    %1168 = vmatprep.subr.mxu0 0.0
    %1169 = vmatpush1.msra.mxu0 0.0
    %1170 = vmatprep.subr.mxu0 0.0
    %1171 = vmatpush1.msra.mxu0 0.0
    %1172 = vmatprep.subr.mxu0 0.0
    %1173 = vmatpush1.msra.mxu0 0.0
    %1174 = vmatprep.subr.mxu0 0.0
    %1175 = vmatpush1.msra.mxu0 0.0
    %1176 = vmatprep.subr.mxu0 0.0
    %1177 = vmatpush1.msra.mxu0 0.0
    %1178 = vmatprep.subr.mxu0 0.0
    %1179 = vmatpush1.msra.mxu0 0.0
    %1180 = vmatprep.subr.mxu0 0.0
    %1181 = vmatpush1.msra.mxu0 0.0
    %1182 = vmatprep.mubr.f32.mxu0 0.0
    %v1183 = vand.u32 %v755, 4294901760
    %v1184 = vsub.f32 %v755, %v1183
    %v1185 = vand.u32 %v1184, 4294901760
    %1186 = vmatmul.mubr.f32.gmra.mrb[0].mxu0 %v1185
    %v1187 = vpop.f32.mrb[0].mxu0
    %v1188 = vadd.f32 %v1099, %v1187
    %v1189 = vpop.f32.mrb[0].mxu0
    %1190 = vdwg.mxu0
    %1191 = vmatprep.subr.mxu0 0.0
    %v1192 = vand.u32 %v96, 4294901760
    %v1193 = vsub.f32 %v96, %v1192
    %v1194 = vand.u32 %v1193, 4294901760
    %1195 = vmatpush1.msra.mxu0 %v1194
    %1196 = vmatprep.subr.mxu0 0.0
    %v1197 = vand.u32 %v97, 4294901760
    %v1198 = vsub.f32 %v97, %v1197
    %v1199 = vand.u32 %v1198, 4294901760
    %1200 = vmatpush1.msra.mxu0 %v1199
    %1201 = vmatprep.subr.mxu0 0.0
    %v1202 = vand.u32 %v98, 4294901760
    %v1203 = vsub.f32 %v98, %v1202
    %v1204 = vand.u32 %v1203, 4294901760
    %1205 = vmatpush1.msra.mxu0 %v1204
    %1206 = vmatprep.subr.mxu0 0.0
    %v1207 = vand.u32 %v99, 4294901760
    %v1208 = vsub.f32 %v99, %v1207
    %v1209 = vand.u32 %v1208, 4294901760
    %1210 = vmatpush1.msra.mxu0 %v1209
    %1211 = vmatprep.subr.mxu0 0.0
    %v1212 = vand.u32 %v100, 4294901760
    %v1213 = vsub.f32 %v100, %v1212
    %v1214 = vand.u32 %v1213, 4294901760
    %1215 = vmatpush1.msra.mxu0 %v1214
    %1216 = vmatprep.subr.mxu0 0.0
    %v1217 = vand.u32 %v101, 4294901760
    %v1218 = vsub.f32 %v101, %v1217
    %v1219 = vand.u32 %v1218, 4294901760
    %1220 = vmatpush1.msra.mxu0 %v1219
    %1221 = vmatprep.subr.mxu0 0.0
    %v1222 = vand.u32 %v102, 4294901760
    %v1223 = vsub.f32 %v102, %v1222
    %v1224 = vand.u32 %v1223, 4294901760
    %1225 = vmatpush1.msra.mxu0 %v1224
    %1226 = vmatprep.subr.mxu0 0.0
    %v1227 = vand.u32 %v103, 4294901760
    %v1228 = vsub.f32 %v103, %v1227
    %v1229 = vand.u32 %v1228, 4294901760
    %1230 = vmatpush1.msra.mxu0 %v1229
    %1231 = vmatprep.subr.mxu0 0.0
    %v1232 = vand.u32 %v104, 4294901760
    %v1233 = vsub.f32 %v104, %v1232
    %v1234 = vand.u32 %v1233, 4294901760
    %1235 = vmatpush1.msra.mxu0 %v1234
    %1236 = vmatprep.subr.mxu0 0.0
    %v1237 = vand.u32 %v105, 4294901760
    %v1238 = vsub.f32 %v105, %v1237
    %v1239 = vand.u32 %v1238, 4294901760
    %1240 = vmatpush1.msra.mxu0 %v1239
    %1241 = vmatprep.subr.mxu0 0.0
    %v1242 = vand.u32 %v106, 4294901760
    %v1243 = vsub.f32 %v106, %v1242
    %v1244 = vand.u32 %v1243, 4294901760
    %1245 = vmatpush1.msra.mxu0 %v1244
    %1246 = vmatprep.subr.mxu0 0.0
    %v1247 = vand.u32 %v107, 4294901760
    %v1248 = vsub.f32 %v107, %v1247
    %v1249 = vand.u32 %v1248, 4294901760
    %1250 = vmatpush1.msra.mxu0 %v1249
    %1251 = vmatprep.subr.mxu0 0.0
    %v1252 = vand.u32 %v108, 4294901760
    %v1253 = vsub.f32 %v108, %v1252
    %v1254 = vand.u32 %v1253, 4294901760
    %1255 = vmatpush1.msra.mxu0 %v1254
    %1256 = vmatprep.subr.mxu0 0.0
    %v1257 = vand.u32 %v109, 4294901760
    %v1258 = vsub.f32 %v109, %v1257
    %v1259 = vand.u32 %v1258, 4294901760
    %1260 = vmatpush1.msra.mxu0 %v1259
    %1261 = vmatprep.subr.mxu0 0.0
    %v1262 = vand.u32 %v110, 4294901760
    %v1263 = vsub.f32 %v110, %v1262
    %v1264 = vand.u32 %v1263, 4294901760
    %1265 = vmatpush1.msra.mxu0 %v1264
    %1266 = vmatprep.subr.mxu0 0.0
    %v1267 = vand.u32 %v111, 4294901760
    %v1268 = vsub.f32 %v111, %v1267
    %v1269 = vand.u32 %v1268, 4294901760
    %1270 = vmatpush1.msra.mxu0 %v1269
    %1271 = vmatprep.subr.mxu0 0.0
    %1272 = vmatpush1.msra.mxu0 0.0
    %1273 = vmatprep.subr.mxu0 0.0
    %1274 = vmatpush1.msra.mxu0 0.0
    %1275 = vmatprep.subr.mxu0 0.0
    %1276 = vmatpush1.msra.mxu0 0.0
    %1277 = vmatprep.subr.mxu0 0.0
    %1278 = vmatpush1.msra.mxu0 0.0
    %1279 = vmatprep.subr.mxu0 0.0
    %1280 = vmatpush1.msra.mxu0 0.0
    %1281 = vmatprep.subr.mxu0 0.0
    %1282 = vmatpush1.msra.mxu0 0.0
    %1283 = vmatprep.subr.mxu0 0.0
    %1284 = vmatpush1.msra.mxu0 0.0
    %1285 = vmatprep.subr.mxu0 0.0
    %1286 = vmatpush1.msra.mxu0 0.0
    %1287 = vmatprep.subr.mxu0 0.0
    %1288 = vmatpush1.msra.mxu0 0.0
    %1289 = vmatprep.subr.mxu0 0.0
    %1290 = vmatpush1.msra.mxu0 0.0
    %1291 = vmatprep.subr.mxu0 0.0
    %1292 = vmatpush1.msra.mxu0 0.0
    %1293 = vmatprep.subr.mxu0 0.0
    %1294 = vmatpush1.msra.mxu0 0.0
    %1295 = vmatprep.subr.mxu0 0.0
    %1296 = vmatpush1.msra.mxu0 0.0
    %1297 = vmatprep.subr.mxu0 0.0
    %1298 = vmatpush1.msra.mxu0 0.0
    %1299 = vmatprep.subr.mxu0 0.0
    %1300 = vmatpush1.msra.mxu0 0.0
    %1301 = vmatprep.subr.mxu0 0.0
    %1302 = vmatpush1.msra.mxu0 0.0
    %1303 = vmatprep.mubr.f32.mxu0 0.0
    %v1304 = vand.u32 %v755, 4294901760
    %1305 = vmatmul.mubr.f32.gmra.mrb[0].mxu0 %v1304
    %v1306 = vpop.f32.mrb[0].mxu0
    %v1307 = vadd.f32 %v1188, %v1306
    %v1308 = vpop.f32.mrb[0].mxu0
    %1309 = vdwg.mxu0
    %1310 = vmatprep.subr.mxu0 0.0
    %v1311 = vand.u32 %v96, 4294901760
    %1312 = vmatpush1.msra.mxu0 %v1311
    %1313 = vmatprep.subr.mxu0 0.0
    %v1314 = vand.u32 %v97, 4294901760
    %1315 = vmatpush1.msra.mxu0 %v1314
    %1316 = vmatprep.subr.mxu0 0.0
    %v1317 = vand.u32 %v98, 4294901760
    %1318 = vmatpush1.msra.mxu0 %v1317
    %1319 = vmatprep.subr.mxu0 0.0
    %v1320 = vand.u32 %v99, 4294901760
    %1321 = vmatpush1.msra.mxu0 %v1320
    %1322 = vmatprep.subr.mxu0 0.0
    %v1323 = vand.u32 %v100, 4294901760
    %1324 = vmatpush1.msra.mxu0 %v1323
    %1325 = vmatprep.subr.mxu0 0.0
    %v1326 = vand.u32 %v101, 4294901760
    %1327 = vmatpush1.msra.mxu0 %v1326
    %1328 = vmatprep.subr.mxu0 0.0
    %v1329 = vand.u32 %v102, 4294901760
    %1330 = vmatpush1.msra.mxu0 %v1329
    %1331 = vmatprep.subr.mxu0 0.0
    %v1332 = vand.u32 %v103, 4294901760
    %1333 = vmatpush1.msra.mxu0 %v1332
    %1334 = vmatprep.subr.mxu0 0.0
    %v1335 = vand.u32 %v104, 4294901760
    %1336 = vmatpush1.msra.mxu0 %v1335
    %1337 = vmatprep.subr.mxu0 0.0
    %v1338 = vand.u32 %v105, 4294901760
    %1339 = vmatpush1.msra.mxu0 %v1338
    %1340 = vmatprep.subr.mxu0 0.0
    %v1341 = vand.u32 %v106, 4294901760
    %1342 = vmatpush1.msra.mxu0 %v1341
    %1343 = vmatprep.subr.mxu0 0.0
    %v1344 = vand.u32 %v107, 4294901760
    %1345 = vmatpush1.msra.mxu0 %v1344
    %1346 = vmatprep.subr.mxu0 0.0
    %v1347 = vand.u32 %v108, 4294901760
    %1348 = vmatpush1.msra.mxu0 %v1347
    %1349 = vmatprep.subr.mxu0 0.0
    %v1350 = vand.u32 %v109, 4294901760
    %1351 = vmatpush1.msra.mxu0 %v1350
    %1352 = vmatprep.subr.mxu0 0.0
    %v1353 = vand.u32 %v110, 4294901760
    %1354 = vmatpush1.msra.mxu0 %v1353
    %1355 = vmatprep.subr.mxu0 0.0
    %v1356 = vand.u32 %v111, 4294901760
    %1357 = vmatpush1.msra.mxu0 %v1356
    %1358 = vmatprep.subr.mxu0 0.0
    %1359 = vmatpush1.msra.mxu0 0.0
    %1360 = vmatprep.subr.mxu0 0.0
    %1361 = vmatpush1.msra.mxu0 0.0
    %1362 = vmatprep.subr.mxu0 0.0
    %1363 = vmatpush1.msra.mxu0 0.0
    %1364 = vmatprep.subr.mxu0 0.0
    %1365 = vmatpush1.msra.mxu0 0.0
    %1366 = vmatprep.subr.mxu0 0.0
    %1367 = vmatpush1.msra.mxu0 0.0
    %1368 = vmatprep.subr.mxu0 0.0
    %1369 = vmatpush1.msra.mxu0 0.0
    %1370 = vmatprep.subr.mxu0 0.0
    %1371 = vmatpush1.msra.mxu0 0.0
    %1372 = vmatprep.subr.mxu0 0.0
    %1373 = vmatpush1.msra.mxu0 0.0
    %1374 = vmatprep.subr.mxu0 0.0
    %1375 = vmatpush1.msra.mxu0 0.0
    %1376 = vmatprep.subr.mxu0 0.0
    %1377 = vmatpush1.msra.mxu0 0.0
    %1378 = vmatprep.subr.mxu0 0.0
    %1379 = vmatpush1.msra.mxu0 0.0
    %1380 = vmatprep.subr.mxu0 0.0
    %1381 = vmatpush1.msra.mxu0 0.0
    %1382 = vmatprep.subr.mxu0 0.0
    %1383 = vmatpush1.msra.mxu0 0.0
    %1384 = vmatprep.subr.mxu0 0.0
    %1385 = vmatpush1.msra.mxu0 0.0
    %1386 = vmatprep.subr.mxu0 0.0
    %1387 = vmatpush1.msra.mxu0 0.0
    %1388 = vmatprep.subr.mxu0 0.0
    %1389 = vmatpush1.msra.mxu0 0.0
    %1390 = vmatprep.mubr.f32.mxu0 0.0
    %v1391 = vand.u32 %v755, 4294901760
    %1392 = vmatmul.mubr.f32.gmra.mrb[0].mxu0 %v1391
    %v1393 = vpop.f32.mrb[0].mxu0
    %v1394 = vadd.f32 %v1307, %v1393
    %v1395 = vpop.f32.mrb[0].mxu0
    %1396 = vdwg.mxu0
    %v1397 = vmul.f32 %v1394, 0.032258064
    %v1398 = vrsqrt.pop %v1397
    %v1399 = vmul.f32 %v1397, %v1398
    %vm1400 = vcmp.eq.f32.partialorder %v1397, inf
    %v1401 = vsel %vm1400, %v1397, %v1399
    %vm1402 = vcmp.eq.f32.partialorder %v1397, 0.0
    %v1403 = vand.u32 %v1397, 2147483648
    %v1404 = vsel %vm1402, %v1403, %v1401
    %v1405 = vadd.f32 %v1404, 1e-06
    %v1406 = vrcp.pop %v1405
    %v1407 = vmul.f32 1.0, %v1406
    %v1408 = vmul.f32 %v754, %v1407
    %v1409 = vld [vmem:[%s1] sm:$0x1]
    %v1411 = vlaneseq
    %v1412 = vshrl.u32 %v1411, 7
    %v1413 = vsub.s32 0, %v1412
    %v1414 = vrot.slane %v1409, %v1413
    %v1416 = vmul.f32 %v1408, %v1414
    %v1417 = vld [vmem:[%s2] sm:$0x1]
    %v1419 = vlaneseq
    %v1420 = vshrl.u32 %v1419, 7
    %v1421 = vsub.s32 0, %v1420
    %v1422 = vrot.slane %v1417, %v1421
    %v1424 = vadd.f32 %v1416, %v1422
    %1425 = vst [vmem:[#allocation5] sm:$0xf] %v1424
    // Predicated region
    $region18: #{tpu_custom_call.1} parent=1 // pred_check
      _
    $region19: #{tpu_custom_call.1} parent=1 // pred_check_branch
      %1427 = sbr.rel (0) target = $region21
    $region20: #{tpu_custom_call.1} parent=1 // pred_region
      %s1429 = ssub.s32 64, 64
      %1430 = vsyncadd [#allocation4], %s1429
      %s1432 = sshll.u32 [#allocation5], 4
      %s1433 = int_to_ptr.vmem [resolvable:$true] %s1432
      %1435 = dma.vmem_to_hbm [thread:$0]  %s1433, 64, %s3, [#allocation4]
    $region21: #{tpu_custom_call.1} parent=1 // pred_fallthru
      _
    // Predicated region
    $region22: #{tpu_custom_call.1} parent=1 // pred_check
      _
    $region23: #{tpu_custom_call.1} parent=1 // pred_check_branch
      %1437 = sbr.rel (0) target = $region25
    $region24: #{tpu_custom_call.1} parent=1 // pred_region
      %1438 = dma.done [#allocation4], 64
    $region25: #{tpu_custom_call.1} parent=1 // pred_fallthru
      _
    %1439 = vsyncpa [#allocation3], 1
    %1440 = vsyncpa [#allocation4], 1

</llo_original>
